<compile_context>
chip_gen: v6e
topology: v6e:2x2x1
jax: 0.10.0
libtpu: 0.0.40
codegen_flags: <defaults>
</compile_context>

<pallas_src>
import functools

import jax
import jax.numpy as jnp
from jax import lax
from jax.experimental import pallas as pl
from jax.experimental.pallas import tpu as pltpu


_LANE_ALIGN = 256                 # MXU-friendly feature-tile alignment (mult. of 128)
_MIN_PALLAS_BYTES = 128 << 10     # below this, a single fused XLA matmul wins


def _round_up(x: int, m: int) -> int:
    return ((x + m - 1) // m) * m


def _vmem_capacity_bytes() -> int:
    try:
        return int(pltpu.get_tpu_info().vmem_capacity_bytes)
    except Exception:  # noqa: BLE001 - conservative fallback (v7x per-core VMEM)
        return 64 << 20


def _gram_kernel(x_ref, g_ref, *, f, tile_f, steps_per_split, mask_cols):
    """One reduction step: G_partial (+)= X_tile @ X_tile^T."""
    kk = pl.program_id(1)
    x = x_ref[...]

    if mask_cols:
        # Logical (unclamped) step index -> global column offset of this tile.
        # Columns >= f (ragged tail or fully redundant padded steps) are zeroed
        # BEFORE the dot so out-of-range block contents never reach G.
        step = pl.program_id(0) * steps_per_split + kk
        col = step * tile_f + lax.broadcasted_iota(jnp.int32, x.shape, 1)
        x = jnp.where(col < f, x, jnp.zeros_like(x))

    # Contract the lane (feature) axis of both operands: stays on the MXU
    # (transposed-RHS path), f32 accumulation, no cross-lane transpose.
    prod = lax.dot_general(
        x, x,
        dimension_numbers=(((1,), (1,)), ((), ())),
        preferred_element_type=jnp.float32,
    )

    @pl.when(kk == 0)
    def _init():
        g_ref[0] = prod            # first step writes directly: no zero-init traffic

    @pl.when(kk != 0)
    def _accumulate():
        g_ref[0] += prod


def _gram_pallas(feature: jax.Array, max_tile_f) -> jax.Array:
    b, f = feature.shape
    itemsize = jnp.dtype(feature.dtype).itemsize

    # ---- Generation-aware VMEM budgeting -----------------------------------
    vmem_cap = _vmem_capacity_bytes()                # 128 MiB v5e/v6e, 64 MiB v7x
    ceiling = max(vmem_cap - (16 << 20), 16 << 20)   # leave headroom below physical
    out_bytes = 4 * b * b * 4                        # double-buffered (1,b,b) f32 partial
    headroom = 4 << 20                               # iota/mask temporaries, scratch
    input_budget = max(ceiling - out_bytes - headroom, 1 << 20)
    # Per feature column: double-buffered input tile + one working (masked)
    # copy + int32 iota.
    per_col = b * (3 * itemsize + 4)

    tile_f = max(_LANE_ALIGN, (input_budget // per_col) // _LANE_ALIGN * _LANE_ALIGN)
    tile_f = min(tile_f, _round_up(f, _LANE_ALIGN))
    if max_tile_f is not None:
        tile_f = min(tile_f, max(_LANE_ALIGN, max_tile_f // _LANE_ALIGN * _LANE_ALIGN))

    n_steps = -(-f // tile_f)
    # Two-way split of the reduction: feeds both TensorCores on v7x megacore;
    # degenerates to a cheap extra loop iteration on single-core chips.
    n_split = 2 if n_steps >= 2 else 1
    steps_per_split = -(-n_steps // n_split)
    total_steps = n_split * steps_per_split
    mask_cols = (total_steps * tile_f) != f

    if total_steps == n_steps:
        in_index = lambda c, kk: (0, c * steps_per_split + kk)
    else:
        last_blk = n_steps - 1
        # Clamp redundant trailing steps onto the last valid block; their
        # contribution is zeroed by the in-kernel column mask.
        in_index = lambda c, kk: (0, jnp.minimum(c * steps_per_split + kk, last_blk))

    # vmem limit derived from the actual block footprint (never clamped below
    # what the chosen tiles need), capped below physical VMEM.
    req = per_col * tile_f + out_bytes + headroom
    vmem_limit = int(min(max(req, 8 << 20), ceiling))

    kernel = functools.partial(
        _gram_kernel, f=f, tile_f=tile_f,
        steps_per_split=steps_per_split, mask_cols=mask_cols)

    partials = pl.pallas_call(
        kernel,
        out_shape=jax.ShapeDtypeStruct((n_split, b, b), jnp.float32),
        grid_spec=pltpu.PrefetchScalarGridSpec(
            num_scalar_prefetch=0,
            grid=(n_split, steps_per_split),
            in_specs=[pl.BlockSpec((b, tile_f), in_index)],
            out_specs=pl.BlockSpec((1, b, b), lambda c, kk: (c, 0, 0)),
        ),
        compiler_params=pltpu.CompilerParams(
            dimension_semantics=("parallel", "arbitrary"),
            vmem_limit_bytes=vmem_limit,
        ),
        cost_estimate=pl.CostEstimate(
            flops=2 * b * b * f,
            transcendentals=0,
            bytes_accessed=b * f * itemsize + n_split * b * b * 4,
        ),
    )(feature)

    # Tiny (n_split, b, b) -> (b, b) reduction outside the kernel.
    return jnp.sum(partials, axis=0)


def _gram_forward(feature, max_tile_f, min_pallas_bytes):
    b, f = feature.shape
    itemsize = jnp.dtype(feature.dtype).itemsize
    if b * f * itemsize < min_pallas_bytes:
        # Tiny problem: a single grid step would be dominated by launch /
        # pipeline prologue; XLA's fused matmul is already optimal.
        return jnp.dot(feature, feature.T, preferred_element_type=jnp.float32)
    return _gram_pallas(feature, max_tile_f)


@functools.partial(jax.custom_vjp, nondiff_argnums=(1, 2))
def _gram(feature, max_tile_f, min_pallas_bytes):
    return _gram_forward(feature, max_tile_f, min_pallas_bytes)


def _gram_fwd(feature, max_tile_f, min_pallas_bytes):
    return _gram_forward(feature, max_tile_f, min_pallas_bytes), feature


def _gram_bwd(max_tile_f, min_pallas_bytes, feature, g_bar):
    # G = F F^T  =>  dF = (dG + dG^T) @ F   (mem-bound, tiny vs forward; plain JAX)
    sym = g_bar + g_bar.T
    return (jnp.dot(sym, feature.astype(sym.dtype)).astype(feature.dtype),)


_gram.defvjp(_gram_fwd, _gram_bwd)


def gram_matrix(feature: jax.Array, *, max_tile_f: int | None = None,
                min_pallas_bytes: int = _MIN_PALLAS_BYTES) -> jax.Array:
    """G = feature @ feature.T (f32), Pallas TPU hot path + custom VJP."""
    return _gram(feature, max_tile_f, min_pallas_bytes)


@functools.partial(jax.jit,
                   static_argnames=("k", "regularization_weight", "min_pallas_bytes"))
def batch_spectral_shrinkage(feature: jax.Array,
                             k: int = 1,
                             regularization_weight: float = 0.5,
                             min_pallas_bytes: int = _MIN_PALLAS_BYTES) -> jax.Array:
    """L_bss = w * sum of squares of the k smallest singular values of F^T."""
    b, f = feature.shape
    num = min(b, f)              # number of singular values torch.svd returns
    if not 1 <= k <= num:
        raise ValueError(f"k={k} must satisfy 1 <= k <= min(b, f) = {num}")

    g = gram_matrix(feature, min_pallas_bytes=min_pallas_bytes)  # Pallas hot path

    # TODO(synk): eigensolve has no Pallas equivalent; plain JAX on the tiny
    # (b, b) Gram matrix.  f32 Gram+eigh squares the conditioning of the
    # smallest singular values; use float64 here for very ill-conditioned F.
    eigvals = jnp.maximum(jnp.linalg.eigvalsh(g), 0.0)   # ascending, length b
    # Top `num` eigenvalues are the genuine sigma^2; the k smallest singular
    # values correspond to eigvals[b - num : b - num + k].
    smallest_k_sq = eigvals[b - num:b - num + k]
    return regularization_weight * jnp.sum(smallest_k_sq)


if __name__ == "__main__":
    # 1) Pallas Gram kernel on a ragged, multi-step grid (exercises in-kernel
    #    column masking, the 2-way reduction split and cross-step accumulation).
    b, f = 8, 1280
    x = jax.random.normal(jax.random.PRNGKey(0), (b, f), dtype=jnp.float32)
    g = jax.block_until_ready(gram_matrix(x, max_tile_f=512, min_pallas_bytes=0))
    g_ref = jnp.dot(x, x.T)
    assert jnp.allclose(g, g_ref, rtol=1e-4, atol=5e-2), \
        float(jnp.max(jnp.abs(g - g_ref)))

    # 2) End-to-end BSS loss (Pallas path forced) vs a direct SVD reference.
    kb, kf = 8, 256
    feat = jax.random.normal(jax.random.PRNGKey(1), (kb, kf), dtype=jnp.float32)
    k, reg_w = 2, 0.5
    out = jax.block_until_ready(
        batch_spectral_shrinkage(feat, k=k, regularization_weight=reg_w,
                                 min_pallas_bytes=0))
    s = jnp.linalg.svd(feat.T, compute_uv=False)          # descending, len min(kf, kb)
    num = s.shape[0]
    ref = reg_w * jnp.sum(s[num - k:] ** 2)
    assert jnp.allclose(out, ref, rtol=1e-3, atol=1e-2), (float(out), float(ref))

    # 3) Gradient path (custom_vjp on the Pallas Gram, eigh VJP in plain JAX).
    grads = jax.grad(lambda z: batch_spectral_shrinkage(
        z, k=k, regularization_weight=reg_w, min_pallas_bytes=0))(feat)
    grads = jax.block_until_ready(grads)
    assert grads.shape == feat.shape and bool(jnp.all(jnp.isfinite(grads)))

    print("KERNEL_OK")
</pallas_src>

<mosaic_0001>
module attributes {stable_mosaic.version = 11 : i64} {
  func.func @_gram_kernel(%arg0: i32, %arg1: i32, %arg2: memref<8x512xf32, #tpu.memory_space<vmem>>, %arg3: memref<1x8x8xf32, #tpu.memory_space<vmem>>) attributes {dimension_semantics = [#tpu.dimension_semantics<parallel>, #tpu.dimension_semantics<arbitrary>], iteration_bounds = array<i64: 2, 2>, scalar_prefetch = 0 : i64, scratch_operands = 0 : i64, tpu.core_type = #tpu.core_type<tc>, window_params = [{transform_indices = @transform_0, window_bounds = array<i64: 8, 512>}, {transform_indices = @transform_1, window_bounds = array<i64: 1, 8, 8>}]} {
    %c0 = arith.constant 0 : index
    %c0_0 = arith.constant 0 : index
    %0 = vector.load %arg2[%c0, %c0_0] : memref<8x512xf32, #tpu.memory_space<vmem>>, vector<8x512xf32>
    %c2_i32 = arith.constant 2 : i32
    %1 = arith.muli %arg0, %c2_i32 : i32
    %2 = arith.addi %1, %arg1 : i32
    %c512_i32 = arith.constant 512 : i32
    %3 = arith.muli %2, %c512_i32 : i32
    %4 = tpu.iota {dimensions = array<i32: 1>} : vector<8x512xi32>
    %5 = vector.broadcast %3 : i32 to vector<8x512xi32>
    %6 = arith.addi %5, %4 : vector<8x512xi32>
    %c1280_i32 = arith.constant 1280 : i32
    %7 = vector.broadcast %c1280_i32 : i32 to vector<8x512xi32>
    %8 = arith.cmpi slt, %6, %7 : vector<8x512xi32>
    %cst = arith.constant 0.000000e+00 : f32
    %9 = vector.broadcast %cst : f32 to vector<8x512xf32>
    %10 = arith.select %8, %0, %9 : vector<8x512xi1>, vector<8x512xf32>
    %cst_1 = arith.constant dense<0.000000e+00> : vector<8x8xf32>
    %11 = tpu.matmul %10, %10, %cst_1 {dimension_numbers = #tpu.dot_dimension_numbers<[1], [1], [0], [0], [0, 0, 1, 0], [], []>} : vector<8x512xf32>, vector<8x512xf32>, vector<8x8xf32> -> vector<8x8xf32>
    %c0_i32 = arith.constant 0 : i32
    %12 = arith.cmpi eq, %arg1, %c0_i32 : i32
    %13 = arith.extui %12 : i1 to i32
    %c0_i32_2 = arith.constant 0 : i32
    %14 = arith.cmpi ne, %13, %c0_i32_2 : i32
    scf.if %14 {
      %c0_5 = arith.constant 0 : index
      %c0_6 = arith.constant 0 : index
      %c0_7 = arith.constant 0 : index
      %18 = vector.load %arg3[%c0_5, %c0_6, %c0_7] : memref<1x8x8xf32, #tpu.memory_space<vmem>>, vector<1x8x8xf32>
      %19 = vector.shape_cast %18 : vector<1x8x8xf32> to vector<8x8xf32>
      %20 = vector.shape_cast %11 : vector<8x8xf32> to vector<1x8x8xf32>
      tpu.vector_store %arg3[%c0_5, %c0_6, %c0_7], %20 {strides = array<i32>} : memref<1x8x8xf32, #tpu.memory_space<vmem>>, vector<1x8x8xf32>,
    } else {
    }
    %c0_i32_3 = arith.constant 0 : i32
    %15 = arith.cmpi ne, %arg1, %c0_i32_3 : i32
    %16 = arith.extui %15 : i1 to i32
    %c0_i32_4 = arith.constant 0 : i32
    %17 = arith.cmpi ne, %16, %c0_i32_4 : i32
    scf.if %17 {
      %c0_5 = arith.constant 0 : index
      %c0_6 = arith.constant 0 : index
      %c0_7 = arith.constant 0 : index
      %18 = vector.load %arg3[%c0_5, %c0_6, %c0_7] : memref<1x8x8xf32, #tpu.memory_space<vmem>>, vector<1x8x8xf32>
      %19 = vector.shape_cast %18 : vector<1x8x8xf32> to vector<8x8xf32>
      %20 = arith.addf %19, %11 : vector<8x8xf32>
      %c0_8 = arith.constant 0 : index
      %c0_9 = arith.constant 0 : index
      %c0_10 = arith.constant 0 : index
      %21 = vector.load %arg3[%c0_8, %c0_9, %c0_10] : memref<1x8x8xf32, #tpu.memory_space<vmem>>, vector<1x8x8xf32>
      %22 = vector.shape_cast %21 : vector<1x8x8xf32> to vector<8x8xf32>
      %23 = vector.shape_cast %20 : vector<8x8xf32> to vector<1x8x8xf32>
      tpu.vector_store %arg3[%c0_8, %c0_9, %c0_10], %23 {strides = array<i32>} : memref<1x8x8xf32, #tpu.memory_space<vmem>>, vector<1x8x8xf32>,
    } else {
    }
    return
  }
  func.func @transform_0(%arg0: i32, %arg1: i32) -> (i32, i32) {
    %c2_i32 = arith.constant 2 : i32
    %0 = arith.muli %arg0, %c2_i32 : i32
    %1 = arith.addi %0, %arg1 : i32
    %c2_i32_0 = arith.constant 2 : i32
    %2 = arith.minsi %1, %c2_i32_0 : i32
    %c0_i32 = arith.constant 0 : i32
    %c0_i32_1 = arith.constant 0 : i32
    return %c0_i32, %2 : i32, i32
  }
  func.func @transform_1(%arg0: i32, %arg1: i32) -> (i32, i32, i32) {
    %c0_i32 = arith.constant 0 : i32
    %c0_i32_0 = arith.constant 0 : i32
    %c0_i32_1 = arith.constant 0 : i32
    return %arg0, %c0_i32, %c0_i32_0 : i32, i32, i32
  }
}

</mosaic_0001>

<llo_original>
// kernel: tpu_custom_call.1
$region0: #{tpu_custom_call.1}
  #allocation0 [shape = 'u32[]', space=smem, size = 0x4, offset = 0x4, fixed_abs, tag = 'smem constant byte address 0x4 - core index']
  #allocation1 [shape = 'u32[144,128]{1,0:T(1,128)}', space=vmem, size = 0x12000, scoped, tag = 'internal scratch']
  %s0 = inlined_call_operand.hbm [shape: f32[8,1280], index: 0, kind: input, shape index: {}]
  %s1 = inlined_call_operand.hbm [shape: f32[2,8,8], index: 1, kind: output, shape index: {}]
  %s2 = sld [smem:[#allocation0]]
  $region49: #{tpu_custom_call.1} parent=0
    _
  %s4 = ssub.s32 1, %s2
  %s5 = scalar_select 0, %s4, %s2
  $region1: #{tpu_custom_call.1} parent=0
    #allocation2 [shape = 'u8[32768]{0}', space=vmem, size = 0x8000, scoped, tag = 'input window, operand 0']
    #allocation3 [shape = 's32[2]{0}', space=sflag, size = 0x8, scoped, tag = 'scoped memory for tpu_custom_call.1']
    #allocation4 [shape = 's32[2]{0}', space=sflag, size = 0x8, scoped, tag = 'scoped memory for tpu_custom_call.1']
    #allocation5 [shape = 'u8[8192]{0}', space=vmem, size = 0x2000, scoped, tag = 'output window, operand 0']
    %6 = vsyncpa [#allocation3], 0
    %s7 = scalar_lea.sflag [#allocation3], 1
    %8 = vsyncpa %s7, 0
    %9 = vsyncpa [#allocation4], 0
    %s10 = scalar_lea.sflag [#allocation4], 1
    %11 = vsyncpa %s10, 0
    loop: start=0, step=1, limit=6
    $region2: #{tpu_custom_call.1} parent=1 // loop_pre_header
      _
    $region3: #{tpu_custom_call.1} parent=1 // loop_header
      %s13 = sphi 0, %s17
      %p14 = scmp.ge.s32.totalorder %s13, 6
      %s20 = sphi 0, %s32
      %s21 = sphi 0, %s28
      %s22 = sphi 0, %s20
      %s23 = sphi 0, %s21
      %s24 = sphi 0, %s22
      %s25 = sphi 0, %s23
      %s43 = sphi 0, %s45
      %s46 = sphi 0, %s43
      %s47 = sphi 0, %s46
      %s63 = sphi 0, %s47
      %s69 = sphi 0, %s71
      %s72 = sphi 0, %s69
      %s73 = sphi 0, %s72
      %s89 = sphi 0, %s73
    $region4: #{tpu_custom_call.1} parent=1 // loop_header_branch
      %16 = sbr.rel (%p14) target = $region8
    $region5: #{tpu_custom_call.1} parent=1 // loop_body
      %s18 = ssub.s32 %s13, 1
      %s19 = ssub.s32 %s13, 2
      %s26 = sadd.s32 1, %s21
      %p27 = scmp.ge.s32.totalorder %s26, 2
      %s28 = scalar_select %p27, 0, %s26
      %s29 = sadd.s32 1, %s20
      %s30 = scalar_select %p27, %s29, %s20
      %p31 = scmp.ge.s32.totalorder %s30, 2
      %s32 = scalar_select %p31, 0, %s30
      %s33 = smul.u32 %s20, 2
      %s34 = sadd.s32 %s33, %s21
      %p35 = scmp.lt.s32.totalorder %s34, 2
      %s36 = scalar_select %p35, %s34, 2
      %s37 = smul.u32 %s32, 2
      %s38 = sadd.s32 %s37, %s28
      %p39 = scmp.lt.s32.totalorder %s38, 2
      %s40 = scalar_select %p39, %s38, 2
      %s41 = ssub.s32 %s36, %s40
      %p42 = scmp.eq.s32.totalorder %s41, 0
      %s44 = sadd.s32 %s43, 1
      %s45 = scalar_select %p42, %s43, %s44
      %p48 = pneg %p42
      %p49 = scmp.eq.s32.totalorder %s13, 3
      %p50 = por %p48, %p49
      %p51 = scmp.ne.s32.totalorder %s43, %s46
      %p52 = scmp.eq.s32.totalorder %s13, 0
      %p53 = por %p51, %p52
      %p54 = scmp.ne.s32.totalorder %s43, %s46
      %p55 = scmp.eq.s32.totalorder %s18, 3
      %p56 = por %p54, %p55
      %p57 = scmp.ne.s32.totalorder %s46, %s47
      %p58 = scmp.eq.s32.totalorder %s18, 0
      %p59 = por %p57, %p58
      %p60 = scmp.ne.s32.totalorder %s46, %s47
      %p61 = scmp.eq.s32.totalorder %s19, 3
      %p62 = por %p60, %p61
      %p64 = scmp.ne.s32.totalorder %s47, %s63
      %p65 = scmp.eq.s32.totalorder %s19, 0
      %p66 = por %p64, %p65
      %s67 = ssub.s32 %s20, %s32
      %p68 = scmp.eq.s32.totalorder %s67, 0
      %s70 = sadd.s32 %s69, 1
      %s71 = scalar_select %p68, %s69, %s70
      %p74 = pneg %p68
      %p75 = scmp.eq.s32.totalorder %s13, 3
      %p76 = por %p74, %p75
      %p77 = scmp.ne.s32.totalorder %s69, %s72
      %p78 = scmp.eq.s32.totalorder %s13, 0
      %p79 = por %p77, %p78
      %p80 = scmp.ne.s32.totalorder %s69, %s72
      %p81 = scmp.eq.s32.totalorder %s18, 3
      %p82 = por %p80, %p81
      %p83 = scmp.ne.s32.totalorder %s72, %s73
      %p84 = scmp.eq.s32.totalorder %s18, 0
      %p85 = por %p83, %p84
      %p86 = scmp.ne.s32.totalorder %s72, %s73
      %p87 = scmp.eq.s32.totalorder %s19, 3
      %p88 = por %p86, %p87
      %p90 = scmp.ne.s32.totalorder %s73, %s89
      %p91 = scmp.eq.s32.totalorder %s19, 0
      %p92 = por %p90, %p91
      %p93 = scmp.le.s32.totalorder 1, %s13
      %p94 = scmp.lt.s32.totalorder %s13, 5
      %p95 = pnand %p93, %p94
      %p96 = pneg %p95
      // Predicated region
      $region9: #{tpu_custom_call.1} parent=5 // pred_check
        _
      $region10: #{tpu_custom_call.1} parent=5 // pred_check_branch
        %98 = sbr.rel (%p95) target = $region12
      $region11: #{tpu_custom_call.1} parent=5 // pred_region
        %s99 = ssub.s32 %s13, 1
      $region12: #{tpu_custom_call.1} parent=5 // pred_fallthru
        _
      %p100 = scmp.lt.s32.totalorder %s13, 4
      // Predicated region
      $region13: #{tpu_custom_call.1} parent=5 // pred_check
        %p101 = pneg %p100
      $region14: #{tpu_custom_call.1} parent=5 // pred_check_branch
        %103 = sbr.rel (%p101) target = $region16
      $region15: #{tpu_custom_call.1} parent=5 // pred_region
        // Predicated region
        $region17: #{tpu_custom_call.1} parent=15 // pred_check
          %p104 = pneg %p53
        $region18: #{tpu_custom_call.1} parent=15 // pred_check_branch
          %106 = sbr.rel (%p104) target = $region20
        $region19: #{tpu_custom_call.1} parent=15 // pred_region
          %s107 = sand.u32 %s43, 1
          %s108 = scalar_lea.sflag [#allocation3], %s107
          %s109 = sand.u32 %s43, 1
          %s110 = smul.addr %s109, 32
          %s111 = scalar_lea.vmem [#allocation2], %s110
          %s112 = smul.u32 %s20, 2
          %s113 = sadd.s32 %s112, %s21
          %p114 = scmp.lt.s32.totalorder %s113, 2
          %s115 = scalar_select %p114, %s113, 2
          %s116 = smul.u32 4, %s115
          %s117 = ssub.s32 10, %s116
          %p118 = scmp.lt.s32.totalorder %s117, 4
          %s119 = scalar_select %p118, %s117, 4
          %s120 = smul.u32 128, %s119
          %s122 = ssub.s32 512, %s120
          %123 = vsyncadd %s108, %s122
          %p124 = scmp.ne.s32.totalorder 0, %s120
          %s125 = smul.addr %s116, 128
          %s126 = scalar_lea.hbm %s0, %s125
          %s127 = smul.u32 %s119, 8
          %s128 = sshll.u32 %s127, 4
          %s129 = sshll.u32 %s111, 4
          %s130 = int_to_ptr.vmem [resolvable:$true] %s129
          %132 = dma.hbm_to_vmem [thread:$0]  (%p124), %s126, %s128, %s130, %s108
        $region20: #{tpu_custom_call.1} parent=15 // pred_fallthru
          _
      $region16: #{tpu_custom_call.1} parent=5 // pred_fallthru
        _
      %p133 = scmp.le.s32.totalorder 1, %s13
      %p134 = scmp.lt.s32.totalorder %s13, 5
      %p135 = pnand %p133, %p134
      %p136 = pneg %p135
      // Predicated region
      $region21: #{tpu_custom_call.1} parent=5 // pred_check
        _
      $region22: #{tpu_custom_call.1} parent=5 // pred_check_branch
        %138 = sbr.rel (%p135) target = $region24
      $region23: #{tpu_custom_call.1} parent=5 // pred_region
        %s139 = ssub.s32 %s13, 1
        %s140 = sand.u32 %s46, 1
        %s141 = scalar_lea.sflag [#allocation3], %s140
        %s142 = sand.u32 %s46, 1
        %s143 = smul.addr %s142, 32
        %s144 = scalar_lea.vmem [#allocation2], %s143
        // Predicated region
        $region25: #{tpu_custom_call.1} parent=23 // pred_check
          %p145 = pneg %p59
        $region26: #{tpu_custom_call.1} parent=23 // pred_check_branch
          %147 = sbr.rel (%p145) target = $region28
        $region27: #{tpu_custom_call.1} parent=23 // pred_region
          %148 = dma.done %s141, 512
        $region28: #{tpu_custom_call.1} parent=23 // pred_fallthru
          _
        %s149 = sand.u32 %s46, 1
        %s150 = scalar_lea.sflag [#allocation3], %s149
        %s151 = sand.u32 %s46, 1
        %s152 = smul.addr %s151, 32
        %s153 = scalar_lea.vmem [#allocation2], %s152
        %p154 = pneg %p59
        %p155 = pneg %p56
        %p156 = pneg %p85
        %p157 = pneg %p82
        %s158 = sand.u32 %s72, 1
        %s159 = scalar_lea.sflag [#allocation4], %s158
        %s160 = sand.u32 %s72, 1
        %s161 = smul.addr %s160, 8
        %s162 = scalar_lea.vmem [#allocation5], %s161
        %s163 = smul.u32 %s22, 2
        %s164 = sadd.s32 %s163, %s23
        %p165 = scmp.lt.s32.totalorder %s164, 2
        %s166 = scalar_select %p165, %s164, 2
        %s167 = smul.u32 4, %s166
        %s168 = ssub.s32 10, %s167
        %p169 = scmp.lt.s32.totalorder %s168, 4
        %s170 = scalar_select %p169, %s168, 4
        %s171 = smul.u32 128, %s170
        %v172 = vld [vmem:[%s144] sm:$0xff]
        %v173 = vld [vmem:[%s144 + $0x8] sm:$0xff]
        %v174 = vld [vmem:[%s144 + $0x10] sm:$0xff]
        %v175 = vld [vmem:[%s144 + $0x18] sm:$0xff]
        %s176 = smul.u32 %s22, 2
        %s177 = sadd.s32 %s176, %s23
        %s178 = smul.u32 %s177, 512
        %v179 = vlaneseq
        %v180 = vand.u32 %v179, 127
        %v181 = vadd.s32 %v180, 128
        %v182 = vadd.s32 %v180, 256
        %v183 = vadd.s32 %v180, 384
        %v184 = vstv %s178
        %v185 = vadd.s32 %v184, %v180
        %v186 = vadd.s32 %v184, %v181
        %v187 = vadd.s32 %v184, %v182
        %v188 = vadd.s32 %v184, %v183
        %vm189 = vcmp.lt.s32.totalorder %v185, 1280
        %vm190 = vcmp.lt.s32.totalorder %v186, 1280
        %vm191 = vcmp.lt.s32.totalorder %v187, 1280
        %vm192 = vcmp.lt.s32.totalorder %v188, 1280
        %v193 = vsel %vm189, %v172, 0.0
        %v194 = vsel %vm190, %v173, 0.0
        %v195 = vsel %vm191, %v174, 0.0
        %v196 = vsel %vm192, %v175, 0.0
        %197 = vmatprep.subr.mxu0 0.0
        %198 = vmatpush1.xpose.msra.mxu0 0.0
        %199 = vmatprep.subr.mxu0 0.0
        %200 = vmatpush1.xpose.msra.mxu0 0.0
        %201 = vmatprep.subr.mxu0 0.0
        %202 = vmatpush1.xpose.msra.mxu0 0.0
        %203 = vmatprep.subr.mxu0 0.0
        %204 = vmatpush1.xpose.msra.mxu0 0.0
        %205 = vmatprep.subr.mxu0 0.0
        %206 = vmatpush1.xpose.msra.mxu0 0.0
        %207 = vmatprep.subr.mxu0 0.0
        %208 = vmatpush1.xpose.msra.mxu0 0.0
        %209 = vmatprep.subr.mxu0 0.0
        %210 = vmatpush1.xpose.msra.mxu0 0.0
        %211 = vmatprep.subr.mxu0 0.0
        %212 = vmatpush1.xpose.msra.mxu0 0.0
        %213 = vmatprep.subr.mxu0 0.0
        %214 = vmatpush1.xpose.msra.mxu0 0.0
        %215 = vmatprep.subr.mxu0 0.0
        %216 = vmatpush1.xpose.msra.mxu0 0.0
        %217 = vmatprep.subr.mxu0 0.0
        %218 = vmatpush1.xpose.msra.mxu0 0.0
        %219 = vmatprep.subr.mxu0 0.0
        %220 = vmatpush1.xpose.msra.mxu0 0.0
        %221 = vmatprep.subr.mxu0 0.0
        %222 = vmatpush1.xpose.msra.mxu0 0.0
        %223 = vmatprep.subr.mxu0 0.0
        %224 = vmatpush1.xpose.msra.mxu0 0.0
        %225 = vmatprep.subr.mxu0 0.0
        %226 = vmatpush1.xpose.msra.mxu0 0.0
        %227 = vmatprep.subr.mxu0 %v194
        %228 = vmatpush1.xpose.msra.mxu0 %v193
        %229 = vmatprep.subr.mxu0 0.0
        %230 = vmatpush2.xpose.msra.mxu0 0.0
        %231 = vmatprep.subr.mxu0 0.0
        %232 = vmatpush2.xpose.msra.mxu0 0.0
        %233 = vmatprep.subr.mxu0 0.0
        %234 = vmatpush2.xpose.msra.mxu0 0.0
        %235 = vmatprep.subr.mxu0 0.0
        %236 = vmatpush2.xpose.msra.mxu0 0.0
        %237 = vmatprep.subr.mxu0 0.0
        %238 = vmatpush2.xpose.msra.mxu0 0.0
        %239 = vmatprep.subr.mxu0 0.0
        %240 = vmatpush2.xpose.msra.mxu0 0.0
        %241 = vmatprep.subr.mxu0 0.0
        %242 = vmatpush2.xpose.msra.mxu0 0.0
        %243 = vmatprep.subr.mxu0 0.0
        %244 = vmatpush2.xpose.msra.mxu0 0.0
        %245 = vmatprep.subr.mxu0 0.0
        %246 = vmatpush2.xpose.msra.mxu0 0.0
        %247 = vmatprep.subr.mxu0 0.0
        %248 = vmatpush2.xpose.msra.mxu0 0.0
        %249 = vmatprep.subr.mxu0 0.0
        %250 = vmatpush2.xpose.msra.mxu0 0.0
        %251 = vmatprep.subr.mxu0 0.0
        %252 = vmatpush2.xpose.msra.mxu0 0.0
        %253 = vmatprep.subr.mxu0 0.0
        %254 = vmatpush2.xpose.msra.mxu0 0.0
        %255 = vmatprep.subr.mxu0 0.0
        %256 = vmatpush2.xpose.msra.mxu0 0.0
        %257 = vmatprep.subr.mxu0 0.0
        %258 = vmatpush2.xpose.msra.mxu0 0.0
        %259 = vmatprep.subr.mxu0 0.0
        %260 = vmatpush2.xpose.msra.mxu0 0.0
        %261 = vmatprep.mubr.f32.mxu0 %v194
        %262 = vmatmul.mubr.f32.gmra.mxu0 %v193
        %v263 = vpop.f32.mrf.mxu0
        %v264 = vadd.f32 0.0, %v263
        %v265 = vpop.f32.mrf.mxu0
        %266 = vdwg.mxu0
        %267 = vmatprep.subr.mxu0 0.0
        %268 = vmatpush1.xpose.msra.mxu0 0.0
        %269 = vmatprep.subr.mxu0 0.0
        %270 = vmatpush1.xpose.msra.mxu0 0.0
        %271 = vmatprep.subr.mxu0 0.0
        %272 = vmatpush1.xpose.msra.mxu0 0.0
        %273 = vmatprep.subr.mxu0 0.0
        %274 = vmatpush1.xpose.msra.mxu0 0.0
        %275 = vmatprep.subr.mxu0 0.0
        %276 = vmatpush1.xpose.msra.mxu0 0.0
        %277 = vmatprep.subr.mxu0 0.0
        %278 = vmatpush1.xpose.msra.mxu0 0.0
        %279 = vmatprep.subr.mxu0 0.0
        %280 = vmatpush1.xpose.msra.mxu0 0.0
        %281 = vmatprep.subr.mxu0 0.0
        %282 = vmatpush1.xpose.msra.mxu0 0.0
        %283 = vmatprep.subr.mxu0 0.0
        %284 = vmatpush1.xpose.msra.mxu0 0.0
        %285 = vmatprep.subr.mxu0 0.0
        %286 = vmatpush1.xpose.msra.mxu0 0.0
        %287 = vmatprep.subr.mxu0 0.0
        %288 = vmatpush1.xpose.msra.mxu0 0.0
        %289 = vmatprep.subr.mxu0 0.0
        %290 = vmatpush1.xpose.msra.mxu0 0.0
        %291 = vmatprep.subr.mxu0 0.0
        %292 = vmatpush1.xpose.msra.mxu0 0.0
        %293 = vmatprep.subr.mxu0 0.0
        %294 = vmatpush1.xpose.msra.mxu0 0.0
        %295 = vmatprep.subr.mxu0 0.0
        %296 = vmatpush1.xpose.msra.mxu0 0.0
        %297 = vmatprep.subr.mxu0 %v196
        %298 = vmatpush1.xpose.msra.mxu0 %v195
        %299 = vmatprep.subr.mxu0 0.0
        %300 = vmatpush2.xpose.msra.mxu0 0.0
        %301 = vmatprep.subr.mxu0 0.0
        %302 = vmatpush2.xpose.msra.mxu0 0.0
        %303 = vmatprep.subr.mxu0 0.0
        %304 = vmatpush2.xpose.msra.mxu0 0.0
        %305 = vmatprep.subr.mxu0 0.0
        %306 = vmatpush2.xpose.msra.mxu0 0.0
        %307 = vmatprep.subr.mxu0 0.0
        %308 = vmatpush2.xpose.msra.mxu0 0.0
        %309 = vmatprep.subr.mxu0 0.0
        %310 = vmatpush2.xpose.msra.mxu0 0.0
        %311 = vmatprep.subr.mxu0 0.0
        %312 = vmatpush2.xpose.msra.mxu0 0.0
        %313 = vmatprep.subr.mxu0 0.0
        %314 = vmatpush2.xpose.msra.mxu0 0.0
        %315 = vmatprep.subr.mxu0 0.0
        %316 = vmatpush2.xpose.msra.mxu0 0.0
        %317 = vmatprep.subr.mxu0 0.0
        %318 = vmatpush2.xpose.msra.mxu0 0.0
        %319 = vmatprep.subr.mxu0 0.0
        %320 = vmatpush2.xpose.msra.mxu0 0.0
        %321 = vmatprep.subr.mxu0 0.0
        %322 = vmatpush2.xpose.msra.mxu0 0.0
        %323 = vmatprep.subr.mxu0 0.0
        %324 = vmatpush2.xpose.msra.mxu0 0.0
        %325 = vmatprep.subr.mxu0 0.0
        %326 = vmatpush2.xpose.msra.mxu0 0.0
        %327 = vmatprep.subr.mxu0 0.0
        %328 = vmatpush2.xpose.msra.mxu0 0.0
        %329 = vmatprep.subr.mxu0 0.0
        %330 = vmatpush2.xpose.msra.mxu0 0.0
        %331 = vmatprep.mubr.f32.mxu0 %v196
        %332 = vmatmul.mubr.f32.gmra.mxu0 %v195
        %v333 = vpop.f32.mrf.mxu0
        %v334 = vadd.f32 %v264, %v333
        %v335 = vpop.f32.mrf.mxu0
        %336 = vdwg.mxu0
        %p337 = scmp.eq.s32.totalorder %s23, 0
        // Predicated region
        $region29: #{tpu_custom_call.1} parent=23 // pred_check
          %p338 = pneg %p337
        $region30: #{tpu_custom_call.1} parent=23 // pred_check_branch
          %340 = sbr.rel (%p338) target = $region32
        $region31: #{tpu_custom_call.1} parent=23 // pred_region
          %vm341 = vcmask 64512
          %342 = vst.msk [vmem:[%s162] sm:$0xff] %vm341, %v334
        $region32: #{tpu_custom_call.1} parent=23 // pred_fallthru
          _
        %p343 = scmp.ne.s32.totalorder %s23, 0
        // Predicated region
        $region33: #{tpu_custom_call.1} parent=23 // pred_check
          %p344 = pneg %p343
        $region34: #{tpu_custom_call.1} parent=23 // pred_check_branch
          %346 = sbr.rel (%p344) target = $region36
        $region35: #{tpu_custom_call.1} parent=23 // pred_region
          %v347 = vld [vmem:[%s162] sm:$0xff]
          %v348 = vadd.f32 %v347, %v334
          %vm349 = vcmask 64512
          %350 = vst.msk [vmem:[%s162] sm:$0xff] %vm349, %v348
        $region36: #{tpu_custom_call.1} parent=23 // pred_fallthru
          _
        %s351 = sand.u32 %s72, 1
        %s352 = scalar_lea.sflag [#allocation4], %s351
        %s353 = sand.u32 %s72, 1
        %s354 = smul.addr %s353, 8
        %s355 = scalar_lea.vmem [#allocation5], %s354
        // Predicated region
        $region37: #{tpu_custom_call.1} parent=23 // pred_check
          %p356 = pneg %p82
        $region38: #{tpu_custom_call.1} parent=23 // pred_check_branch
          %358 = sbr.rel (%p356) target = $region40
        $region39: #{tpu_custom_call.1} parent=23 // pred_region
          %s360 = ssub.s32 128, 128
          %361 = vsyncadd %s352, %s360
          %s362 = smul.addr %s22, 128
          %s363 = scalar_lea.hbm %s1, %s362
          %s365 = sshll.u32 %s355, 4
          %s366 = int_to_ptr.vmem [resolvable:$true] %s365
          %368 = dma.vmem_to_hbm [thread:$0]  %s366, 128, %s363, %s352
        $region40: #{tpu_custom_call.1} parent=23 // pred_fallthru
          _
      $region24: #{tpu_custom_call.1} parent=5 // pred_fallthru
        _
      %p369 = scmp.le.s32.totalorder 2, %s13
      // Predicated region
      $region41: #{tpu_custom_call.1} parent=5 // pred_check
        %p370 = pneg %p369
      $region42: #{tpu_custom_call.1} parent=5 // pred_check_branch
        %372 = sbr.rel (%p370) target = $region44
      $region43: #{tpu_custom_call.1} parent=5 // pred_region
        %s373 = ssub.s32 %s13, 2
        // Predicated region
        $region45: #{tpu_custom_call.1} parent=43 // pred_check
          %p374 = pneg %p88
        $region46: #{tpu_custom_call.1} parent=43 // pred_check_branch
          %376 = sbr.rel (%p374) target = $region48
        $region47: #{tpu_custom_call.1} parent=43 // pred_region
          %s377 = sand.u32 %s73, 1
          %s378 = scalar_lea.sflag [#allocation4], %s377
          %s379 = sand.u32 %s73, 1
          %s380 = smul.addr %s379, 8
          %s381 = scalar_lea.vmem [#allocation5], %s380
          %382 = dma.done %s378, 128
        $region48: #{tpu_custom_call.1} parent=43 // pred_fallthru
          _
      $region44: #{tpu_custom_call.1} parent=5 // pred_fallthru
        _
    $region6: #{tpu_custom_call.1} parent=1 // loop_footer
      %s17 = sadd.s32 1, %s13
    $region7: #{tpu_custom_call.1} parent=1 // loop_footer_branch
      %12 = sbr.rel target = $region3
    $region8: #{tpu_custom_call.1} parent=1 // loop_exit
      _
    %383 = vsyncpa [#allocation3], 1
    %s384 = scalar_lea.sflag [#allocation3], 1
    %385 = vsyncpa %s384, 1
    %386 = vsyncpa [#allocation4], 1
    %s387 = scalar_lea.sflag [#allocation4], 1
    %388 = vsyncpa %s387, 1

</llo_original>
